<compile_context>
chip_gen: v7x
topology: tpu7x:2x2x1
jax: 0.10.0
libtpu: 0.0.40
codegen_flags: <defaults>
</compile_context>

<pallas_src>
import jax
import jax.numpy as jnp
from jax.experimental import pallas as pl
from jax.experimental.pallas import tpu as pltpu

HIDDEN = 768
DEFAULT_TILE_M = 1024  # safe across v5e/v6e/v7x; bump to 2048 on v6e/v7x if wanted


def sent_ext_kernel(x_ref, w_ref, b_ref, mask_ref, o_ref):
    # x_ref:    (TILE_M, H) f32   VMEM  (streamed tile of flattened activations)
    # w_ref:    (H, 1)      f32   VMEM  (resident across grid steps)
    # b_ref:    (1, 1)      f32   SMEM  (scalar bias)
    # mask_ref: (TILE_M, 1) f32   VMEM
    # o_ref:    (TILE_M, 1) f32   VMEM
    logits = jnp.dot(x_ref[...], w_ref[...],
                     preferred_element_type=jnp.float32) + b_ref[0, 0]
    o_ref[...] = jax.nn.sigmoid(logits) * mask_ref[...]


def _round_up(n, m):
    return ((n + m - 1) // m) * m


def sentence_ext_layer(x, mask, w, b, *, tile_m=DEFAULT_TILE_M):
    """x: (B, S, 768), mask: (B, S), w: (1, 768), b: (1,) or (1, 1). Returns (B, S) f32."""
    B, S, H = x.shape
    assert H == HIDDEN
    M = B * S

    # Flatten to row-major (B*S, H) / (B*S, 1) and pad rows to a tile multiple.
    tile_m = min(tile_m, _round_up(M, 8))
    Mp = _round_up(M, tile_m)
    pad = Mp - M

    x2 = x.reshape(M, H).astype(jnp.float32)
    mask2 = mask.reshape(M, 1).astype(jnp.float32)
    if pad:
        x2 = jnp.pad(x2, ((0, pad), (0, 0)))
        mask2 = jnp.pad(mask2, ((0, pad), (0, 0)))  # zero mask -> padded rows output 0

    w_col = jnp.asarray(w, jnp.float32).reshape(H, 1)   # (768, 1) column for MXU
    b_sc = jnp.asarray(b, jnp.float32).reshape(1, 1)    # scalar bias for SMEM

    grid = (Mp // tile_m,)

    out = pl.pallas_call(
        sent_ext_kernel,
        out_shape=jax.ShapeDtypeStruct((Mp, 1), jnp.float32),
        grid=grid,
        in_specs=[
            pl.BlockSpec((tile_m, H), lambda i: (i, 0)),                       # x tile
            pl.BlockSpec((H, 1), lambda i: (0, 0)),                            # w (resident)
            pl.BlockSpec(memory_space=pltpu.MemorySpace.SMEM),                 # bias scalar
            pl.BlockSpec((tile_m, 1), lambda i: (i, 0)),                       # mask tile
        ],
        out_specs=pl.BlockSpec((tile_m, 1), lambda i: (i, 0)),
        compiler_params=pltpu.CompilerParams(
            dimension_semantics=("parallel",),
        ),
        cost_estimate=pl.CostEstimate(
            flops=2 * Mp * H,
            transcendentals=Mp,
            bytes_accessed=4 * (Mp * H + 2 * Mp + H + 1),
        ),
    )(x2, w_col, b_sc, mask2)

    return out[:M, 0].reshape(B, S)


if __name__ == "__main__":
    key = jax.random.PRNGKey(0)
    kx, km, kw, kb = jax.random.split(key, 4)

    B, S = 2, 8
    x = jax.random.normal(kx, (B, S, HIDDEN), dtype=jnp.float32)
    # binary sentence mask (float, like mask.float() in torch)
    mask = (jax.random.uniform(km, (B, S)) > 0.3).astype(jnp.float32)

    # Deterministic synthetic parameters for nn.Linear(768, 1):
    bound_w = (6.0 / (HIDDEN + 1)) ** 0.5
    w = jax.random.uniform(kw, (1, HIDDEN), jnp.float32, -bound_w, bound_w)
    bound_b = 1.0 / (HIDDEN ** 0.5)
    b = jax.random.uniform(kb, (1, 1), jnp.float32, -bound_b, bound_b)

    out = sentence_ext_layer(x, mask, w, b)
    out = jax.block_until_ready(out)

    # Pure-JAX reference check.
    ref = jax.nn.sigmoid(jnp.einsum("bsh,oh->bso", x, w)[..., 0] + b[0, 0]) * mask
    assert out.shape == (B, S)
    assert jnp.allclose(out, ref, atol=1e-5, rtol=1e-5)

    print("KERNEL_OK")
</pallas_src>

<mosaic_0001>
module attributes {stable_mosaic.version = 11 : i64} {
  func.func @sent_ext_kernel(%arg0: i32, %arg1: memref<16x768xf32, #tpu.memory_space<vmem>>, %arg2: memref<768x1xf32, #tpu.memory_space<vmem>>, %arg3: memref<1x1xf32, #tpu.memory_space<smem>>, %arg4: memref<16x1xf32, #tpu.memory_space<vmem>>, %arg5: memref<16x1xf32, #tpu.memory_space<vmem>>) attributes {dimension_semantics = [#tpu.dimension_semantics<parallel>], iteration_bounds = array<i64: 1>, scalar_prefetch = 0 : i64, scratch_operands = 0 : i64, tpu.core_type = #tpu.core_type<tc>, window_params = [{transform_indices = @transform_0, window_bounds = array<i64: 16, 768>}, {pipeline_mode = #tpu.pipeline_mode<synchronous>, transform_indices = @transform_1, window_bounds = array<i64: 768, 1>}, {transform_indices = @transform_2, window_bounds = array<i64: 1, 1>}, {transform_indices = @transform_3, window_bounds = array<i64: 16, 1>}, {transform_indices = @transform_4, window_bounds = array<i64: 16, 1>}]} {
    %c0 = arith.constant 0 : index
    %c0_0 = arith.constant 0 : index
    %0 = vector.load %arg1[%c0, %c0_0] : memref<16x768xf32, #tpu.memory_space<vmem>>, vector<16x768xf32>
    %c0_1 = arith.constant 0 : index
    %c0_2 = arith.constant 0 : index
    %1 = vector.load %arg2[%c0_1, %c0_2] : memref<768x1xf32, #tpu.memory_space<vmem>>, vector<768x1xf32>
    %cst = arith.constant dense<0.000000e+00> : vector<16x1xf32>
    %2 = tpu.matmul %0, %1, %cst {dimension_numbers = #tpu.dot_dimension_numbers<[1], [0], [0], [1], [0, 0, 1, 1], [], []>} : vector<16x768xf32>, vector<768x1xf32>, vector<16x1xf32> -> vector<16x1xf32>
    %c0_3 = arith.constant 0 : index
    %c0_4 = arith.constant 0 : index
    %3 = memref.load %arg3[%c0_3, %c0_4] : memref<1x1xf32, #tpu.memory_space<smem>>
    %4 = vector.broadcast %3 : f32 to vector<16x1xf32>
    %5 = arith.addf %2, %4 : vector<16x1xf32>
    %6 = arith.negf %5 : vector<16x1xf32>
    %7 = math.exp %6 : vector<16x1xf32>
    %cst_5 = arith.constant 1.000000e+00 : f32
    %8 = vector.broadcast %cst_5 : f32 to vector<16x1xf32>
    %9 = arith.addf %8, %7 : vector<16x1xf32>
    %10 = arith.divf %8, %9 : vector<16x1xf32>
    %c0_6 = arith.constant 0 : index
    %c0_7 = arith.constant 0 : index
    %11 = vector.load %arg4[%c0_6, %c0_7] : memref<16x1xf32, #tpu.memory_space<vmem>>, vector<16x1xf32>
    %12 = arith.mulf %10, %11 : vector<16x1xf32>
    %c0_8 = arith.constant 0 : index
    %c0_9 = arith.constant 0 : index
    %13 = vector.load %arg5[%c0_8, %c0_9] : memref<16x1xf32, #tpu.memory_space<vmem>>, vector<16x1xf32>
    tpu.vector_store %arg5[%c0_8, %c0_9], %12 {strides = array<i32>} : memref<16x1xf32, #tpu.memory_space<vmem>>, vector<16x1xf32>,
    return
  }
  func.func @transform_0(%arg0: i32) -> (i32, i32) {
    %c0_i32 = arith.constant 0 : i32
    %c0_i32_0 = arith.constant 0 : i32
    return %arg0, %c0_i32 : i32, i32
  }
  func.func @transform_1(%arg0: i32) -> (i32, i32) {
    %c0_i32 = arith.constant 0 : i32
    %c0_i32_0 = arith.constant 0 : i32
    %c0_i32_1 = arith.constant 0 : i32
    return %c0_i32, %c0_i32_0 : i32, i32
  }
  func.func @transform_2(%arg0: i32) -> (i32, i32) {
    %c0_i32 = arith.constant 0 : i32
    %c0_i32_0 = arith.constant 0 : i32
    %c0_i32_1 = arith.constant 0 : i32
    return %c0_i32, %c0_i32_0 : i32, i32
  }
  func.func @transform_3(%arg0: i32) -> (i32, i32) {
    %c0_i32 = arith.constant 0 : i32
    %c0_i32_0 = arith.constant 0 : i32
    return %arg0, %c0_i32 : i32, i32
  }
  func.func @transform_4(%arg0: i32) -> (i32, i32) {
    %c0_i32 = arith.constant 0 : i32
    %c0_i32_0 = arith.constant 0 : i32
    return %arg0, %c0_i32 : i32, i32
  }
}

</mosaic_0001>

<llo_original>
// kernel: tpu_custom_call.1
$region0: #{tpu_custom_call.1}
  #allocation0 [shape = 'u32[]', space=smem, size = 0x4, offset = 0x4, fixed_abs, tag = 'smem constant byte address 0x4 - core index']
  #allocation1 [shape = 'u32[144,128]{1,0:T(1,128)}', space=vmem, size = 0x12000, scoped, tag = 'internal scratch']
  #allocation2 [shape = 'f32[1,1]{1,0:T(1,128)S(6)}', space=smem, size = 0x200, scoped, tag = 'scoped memory for tpu_custom_call.1']
  %s0 = inlined_call_operand.vmem [shape: f32[16,768], index: 0, kind: input, shape index: {}]
  %s1 = inlined_call_operand.vmem [shape: f32[768,1], index: 1, kind: input, shape index: {}]
  %s2 = inlined_call_operand.<no memory space> [shape: f32[1,1], index: 2, kind: input, shape index: {}]
  %s3 = inlined_call_operand.vmem [shape: f32[16,1], index: 3, kind: input, shape index: {}]
  %s4 = inlined_call_operand.vmem [shape: f32[16,1], index: 4, kind: output, shape index: {}]
  %s5 = sld [smem:[#allocation0]]
  $region26: #{tpu_custom_call.1} parent=0
    _
  %s7 = ssub.s32 1, %s5
  %s8 = scalar_select 0, %s7, %s5
  %9 = sst [smem:[#allocation2]] %s2
  // Predicated region
  $region2: #{tpu_custom_call.1} parent=0 // pred_check
    _
  $region3: #{tpu_custom_call.1} parent=0 // pred_check_branch
    %11 = sbr.rel (0) target = $region5
  $region4: #{tpu_custom_call.1} parent=0 // pred_region
    _
  $region5: #{tpu_custom_call.1} parent=0 // pred_fallthru
    _
  // Predicated region
  $region6: #{tpu_custom_call.1} parent=0 // pred_check
    _
  $region7: #{tpu_custom_call.1} parent=0 // pred_check_branch
    %13 = sbr.rel (0) target = $region9
  $region8: #{tpu_custom_call.1} parent=0 // pred_region
    _
  $region9: #{tpu_custom_call.1} parent=0 // pred_fallthru
    _
  // Predicated region
  $region10: #{tpu_custom_call.1} parent=0 // pred_check
    _
  $region11: #{tpu_custom_call.1} parent=0 // pred_check_branch
    %15 = sbr.rel (0) target = $region13
  $region12: #{tpu_custom_call.1} parent=0 // pred_region
    _
  $region13: #{tpu_custom_call.1} parent=0 // pred_fallthru
    _
  // Predicated region
  $region14: #{tpu_custom_call.1} parent=0 // pred_check
    _
  $region15: #{tpu_custom_call.1} parent=0 // pred_check_branch
    %17 = sbr.rel (0) target = $region17
  $region16: #{tpu_custom_call.1} parent=0 // pred_region
    _
  $region17: #{tpu_custom_call.1} parent=0 // pred_fallthru
    _
  %v18 = vld [vmem:[%s0] sm:$0xff]
  %v19 = vld [vmem:[%s0 + $0x8] sm:$0xff]
  %v20 = vld [vmem:[%s0 + $0x10] sm:$0xff]
  %v21 = vld [vmem:[%s0 + $0x18] sm:$0xff]
  %v22 = vld [vmem:[%s0 + $0x20] sm:$0xff]
  %v23 = vld [vmem:[%s0 + $0x28] sm:$0xff]
  %v24 = vld [vmem:[%s0 + $0x30] sm:$0xff]
  %v25 = vld [vmem:[%s0 + $0x38] sm:$0xff]
  %v26 = vld [vmem:[%s0 + $0x40] sm:$0xff]
  %v27 = vld [vmem:[%s0 + $0x48] sm:$0xff]
  %v28 = vld [vmem:[%s0 + $0x50] sm:$0xff]
  %v29 = vld [vmem:[%s0 + $0x58] sm:$0xff]
  %v30 = vld [vmem:[%s1] sm:$0xff]
  %v31 = vld [vmem:[%s1 + $0x8] sm:$0xff]
  %v32 = vld [vmem:[%s1 + $0x10] sm:$0xff]
  %v33 = vld [vmem:[%s1 + $0x18] sm:$0xff]
  %v34 = vld [vmem:[%s1 + $0x20] sm:$0xff]
  %v35 = vld [vmem:[%s1 + $0x28] sm:$0xff]
  %v36 = vld [vmem:[%s1 + $0x30] sm:$0xff]
  %v37 = vld [vmem:[%s1 + $0x38] sm:$0xff]
  %v38 = vld [vmem:[%s1 + $0x40] sm:$0xff]
  %v39 = vld [vmem:[%s1 + $0x48] sm:$0xff]
  %v40 = vld [vmem:[%s1 + $0x50] sm:$0xff]
  %v41 = vld [vmem:[%s1 + $0x58] sm:$0xff]
  %v42 = vld [vmem:[%s1 + $0x60] sm:$0xff]
  %v43 = vld [vmem:[%s1 + $0x68] sm:$0xff]
  %v44 = vld [vmem:[%s1 + $0x70] sm:$0xff]
  %v45 = vld [vmem:[%s1 + $0x78] sm:$0xff]
  %v46 = vld [vmem:[%s1 + $0x80] sm:$0xff]
  %v47 = vld [vmem:[%s1 + $0x88] sm:$0xff]
  %v48 = vld [vmem:[%s1 + $0x90] sm:$0xff]
  %v49 = vld [vmem:[%s1 + $0x98] sm:$0xff]
  %v50 = vld [vmem:[%s1 + $0xa0] sm:$0xff]
  %v51 = vld [vmem:[%s1 + $0xa8] sm:$0xff]
  %v52 = vld [vmem:[%s1 + $0xb0] sm:$0xff]
  %v53 = vld [vmem:[%s1 + $0xb8] sm:$0xff]
  %v54 = vld [vmem:[%s1 + $0xc0] sm:$0xff]
  %v55 = vld [vmem:[%s1 + $0xc8] sm:$0xff]
  %v56 = vld [vmem:[%s1 + $0xd0] sm:$0xff]
  %v57 = vld [vmem:[%s1 + $0xd8] sm:$0xff]
  %v58 = vld [vmem:[%s1 + $0xe0] sm:$0xff]
  %v59 = vld [vmem:[%s1 + $0xe8] sm:$0xff]
  %v60 = vld [vmem:[%s1 + $0xf0] sm:$0xff]
  %v61 = vld [vmem:[%s1 + $0xf8] sm:$0xff]
  %v62 = vld [vmem:[%s1 + $0x100] sm:$0xff]
  %v63 = vld [vmem:[%s1 + $0x108] sm:$0xff]
  %v64 = vld [vmem:[%s1 + $0x110] sm:$0xff]
  %v65 = vld [vmem:[%s1 + $0x118] sm:$0xff]
  %v66 = vld [vmem:[%s1 + $0x120] sm:$0xff]
  %v67 = vld [vmem:[%s1 + $0x128] sm:$0xff]
  %v68 = vld [vmem:[%s1 + $0x130] sm:$0xff]
  %v69 = vld [vmem:[%s1 + $0x138] sm:$0xff]
  %v70 = vld [vmem:[%s1 + $0x140] sm:$0xff]
  %v71 = vld [vmem:[%s1 + $0x148] sm:$0xff]
  %v72 = vld [vmem:[%s1 + $0x150] sm:$0xff]
  %v73 = vld [vmem:[%s1 + $0x158] sm:$0xff]
  %v74 = vld [vmem:[%s1 + $0x160] sm:$0xff]
  %v75 = vld [vmem:[%s1 + $0x168] sm:$0xff]
  %v76 = vld [vmem:[%s1 + $0x170] sm:$0xff]
  %v77 = vld [vmem:[%s1 + $0x178] sm:$0xff]
  %v78 = vld [vmem:[%s1 + $0x180] sm:$0xff]
  %v79 = vld [vmem:[%s1 + $0x188] sm:$0xff]
  %v80 = vld [vmem:[%s1 + $0x190] sm:$0xff]
  %v81 = vld [vmem:[%s1 + $0x198] sm:$0xff]
  %v82 = vld [vmem:[%s1 + $0x1a0] sm:$0xff]
  %v83 = vld [vmem:[%s1 + $0x1a8] sm:$0xff]
  %v84 = vld [vmem:[%s1 + $0x1b0] sm:$0xff]
  %v85 = vld [vmem:[%s1 + $0x1b8] sm:$0xff]
  %v86 = vld [vmem:[%s1 + $0x1c0] sm:$0xff]
  %v87 = vld [vmem:[%s1 + $0x1c8] sm:$0xff]
  %v88 = vld [vmem:[%s1 + $0x1d0] sm:$0xff]
  %v89 = vld [vmem:[%s1 + $0x1d8] sm:$0xff]
  %v90 = vld [vmem:[%s1 + $0x1e0] sm:$0xff]
  %v91 = vld [vmem:[%s1 + $0x1e8] sm:$0xff]
  %v92 = vld [vmem:[%s1 + $0x1f0] sm:$0xff]
  %v93 = vld [vmem:[%s1 + $0x1f8] sm:$0xff]
  %v94 = vld [vmem:[%s1 + $0x200] sm:$0xff]
  %v95 = vld [vmem:[%s1 + $0x208] sm:$0xff]
  %v96 = vld [vmem:[%s1 + $0x210] sm:$0xff]
  %v97 = vld [vmem:[%s1 + $0x218] sm:$0xff]
  %v98 = vld [vmem:[%s1 + $0x220] sm:$0xff]
  %v99 = vld [vmem:[%s1 + $0x228] sm:$0xff]
  %v100 = vld [vmem:[%s1 + $0x230] sm:$0xff]
  %v101 = vld [vmem:[%s1 + $0x238] sm:$0xff]
  %v102 = vld [vmem:[%s1 + $0x240] sm:$0xff]
  %v103 = vld [vmem:[%s1 + $0x248] sm:$0xff]
  %v104 = vld [vmem:[%s1 + $0x250] sm:$0xff]
  %v105 = vld [vmem:[%s1 + $0x258] sm:$0xff]
  %v106 = vld [vmem:[%s1 + $0x260] sm:$0xff]
  %v107 = vld [vmem:[%s1 + $0x268] sm:$0xff]
  %v108 = vld [vmem:[%s1 + $0x270] sm:$0xff]
  %v109 = vld [vmem:[%s1 + $0x278] sm:$0xff]
  %v110 = vld [vmem:[%s1 + $0x280] sm:$0xff]
  %v111 = vld [vmem:[%s1 + $0x288] sm:$0xff]
  %v112 = vld [vmem:[%s1 + $0x290] sm:$0xff]
  %v113 = vld [vmem:[%s1 + $0x298] sm:$0xff]
  %v114 = vld [vmem:[%s1 + $0x2a0] sm:$0xff]
  %v115 = vld [vmem:[%s1 + $0x2a8] sm:$0xff]
  %v116 = vld [vmem:[%s1 + $0x2b0] sm:$0xff]
  %v117 = vld [vmem:[%s1 + $0x2b8] sm:$0xff]
  %v118 = vld [vmem:[%s1 + $0x2c0] sm:$0xff]
  %v119 = vld [vmem:[%s1 + $0x2c8] sm:$0xff]
  %v120 = vld [vmem:[%s1 + $0x2d0] sm:$0xff]
  %v121 = vld [vmem:[%s1 + $0x2d8] sm:$0xff]
  %v122 = vld [vmem:[%s1 + $0x2e0] sm:$0xff]
  %v123 = vld [vmem:[%s1 + $0x2e8] sm:$0xff]
  %v124 = vld [vmem:[%s1 + $0x2f0] sm:$0xff]
  %v125 = vld [vmem:[%s1 + $0x2f8] sm:$0xff]
  %s126 = sld [smem:[#allocation2]]
  %v127 = vstv %s126
  %128 = vmatprep.subr.mxu0 0.0
  %129 = vmatpush1.msra.mxu0 %v30
  %130 = vmatprep.subr.mxu0 0.0
  %131 = vmatpush1.msra.mxu0 %v31
  %132 = vmatprep.subr.mxu0 0.0
  %133 = vmatpush1.msra.mxu0 %v32
  %134 = vmatprep.subr.mxu0 0.0
  %135 = vmatpush1.msra.mxu0 %v33
  %136 = vmatprep.subr.mxu0 0.0
  %137 = vmatpush1.msra.mxu0 %v34
  %138 = vmatprep.subr.mxu0 0.0
  %139 = vmatpush1.msra.mxu0 %v35
  %140 = vmatprep.subr.mxu0 0.0
  %141 = vmatpush1.msra.mxu0 %v36
  %142 = vmatprep.subr.mxu0 0.0
  %143 = vmatpush1.msra.mxu0 %v37
  %144 = vmatprep.subr.mxu0 0.0
  %145 = vmatpush1.msra.mxu0 %v38
  %146 = vmatprep.subr.mxu0 0.0
  %147 = vmatpush1.msra.mxu0 %v39
  %148 = vmatprep.subr.mxu0 0.0
  %149 = vmatpush1.msra.mxu0 %v40
  %150 = vmatprep.subr.mxu0 0.0
  %151 = vmatpush1.msra.mxu0 %v41
  %152 = vmatprep.subr.mxu0 0.0
  %153 = vmatpush1.msra.mxu0 %v42
  %154 = vmatprep.subr.mxu0 0.0
  %155 = vmatpush1.msra.mxu0 %v43
  %156 = vmatprep.subr.mxu0 0.0
  %157 = vmatpush1.msra.mxu0 %v44
  %158 = vmatprep.subr.mxu0 0.0
  %159 = vmatpush1.msra.mxu0 %v45
  %160 = vmatprep.subr.mxu0 0.0
  %161 = vmatpush1.msra.mxu0 %v46
  %162 = vmatprep.subr.mxu0 0.0
  %163 = vmatpush1.msra.mxu0 %v47
  %164 = vmatprep.subr.mxu0 0.0
  %165 = vmatpush1.msra.mxu0 %v48
  %166 = vmatprep.subr.mxu0 0.0
  %167 = vmatpush1.msra.mxu0 %v49
  %168 = vmatprep.subr.mxu0 0.0
  %169 = vmatpush1.msra.mxu0 %v50
  %170 = vmatprep.subr.mxu0 0.0
  %171 = vmatpush1.msra.mxu0 %v51
  %172 = vmatprep.subr.mxu0 0.0
  %173 = vmatpush1.msra.mxu0 %v52
  %174 = vmatprep.subr.mxu0 0.0
  %175 = vmatpush1.msra.mxu0 %v53
  %176 = vmatprep.subr.mxu0 0.0
  %177 = vmatpush1.msra.mxu0 %v54
  %178 = vmatprep.subr.mxu0 0.0
  %179 = vmatpush1.msra.mxu0 %v55
  %180 = vmatprep.subr.mxu0 0.0
  %181 = vmatpush1.msra.mxu0 %v56
  %182 = vmatprep.subr.mxu0 0.0
  %183 = vmatpush1.msra.mxu0 %v57
  %184 = vmatprep.subr.mxu0 0.0
  %185 = vmatpush1.msra.mxu0 %v58
  %186 = vmatprep.subr.mxu0 0.0
  %187 = vmatpush1.msra.mxu0 %v59
  %188 = vmatprep.subr.mxu0 0.0
  %189 = vmatpush1.msra.mxu0 %v60
  %190 = vmatprep.subr.mxu0 0.0
  %191 = vmatpush1.msra.mxu0 %v61
  %192 = vmatprep.mubr.f32.mxu0 %v19
  %193 = vmatmul.mubr.f32.gmra.mrb[0].mxu0 %v18
  %v194 = vpop.f32.mrb[0].mxu0
  %v195 = vadd.f32 %v127, %v194
  %v196 = vpop.f32.mrb[0].mxu0
  %197 = vmatprep.mubr.f32.mxu0 %v25
  %198 = vmatmul.mubr.f32.gmra.mrb[0].mxu0 %v24
  %v199 = vpop.f32.mrb[0].mxu0
  %v200 = vadd.f32 %v127, %v199
  %v201 = vpop.f32.mrb[0].mxu0
  %202 = vdwg.mxu0
  %203 = vmatprep.subr.mxu0 0.0
  %204 = vmatpush1.msra.mxu0 %v62
  %205 = vmatprep.subr.mxu0 0.0
  %206 = vmatpush1.msra.mxu0 %v63
  %207 = vmatprep.subr.mxu0 0.0
  %208 = vmatpush1.msra.mxu0 %v64
  %209 = vmatprep.subr.mxu0 0.0
  %210 = vmatpush1.msra.mxu0 %v65
  %211 = vmatprep.subr.mxu0 0.0
  %212 = vmatpush1.msra.mxu0 %v66
  %213 = vmatprep.subr.mxu0 0.0
  %214 = vmatpush1.msra.mxu0 %v67
  %215 = vmatprep.subr.mxu0 0.0
  %216 = vmatpush1.msra.mxu0 %v68
  %217 = vmatprep.subr.mxu0 0.0
  %218 = vmatpush1.msra.mxu0 %v69
  %219 = vmatprep.subr.mxu0 0.0
  %220 = vmatpush1.msra.mxu0 %v70
  %221 = vmatprep.subr.mxu0 0.0
  %222 = vmatpush1.msra.mxu0 %v71
  %223 = vmatprep.subr.mxu0 0.0
  %224 = vmatpush1.msra.mxu0 %v72
  %225 = vmatprep.subr.mxu0 0.0
  %226 = vmatpush1.msra.mxu0 %v73
  %227 = vmatprep.subr.mxu0 0.0
  %228 = vmatpush1.msra.mxu0 %v74
  %229 = vmatprep.subr.mxu0 0.0
  %230 = vmatpush1.msra.mxu0 %v75
  %231 = vmatprep.subr.mxu0 0.0
  %232 = vmatpush1.msra.mxu0 %v76
  %233 = vmatprep.subr.mxu0 0.0
  %234 = vmatpush1.msra.mxu0 %v77
  %235 = vmatprep.subr.mxu0 0.0
  %236 = vmatpush1.msra.mxu0 %v78
  %237 = vmatprep.subr.mxu0 0.0
  %238 = vmatpush1.msra.mxu0 %v79
  %239 = vmatprep.subr.mxu0 0.0
  %240 = vmatpush1.msra.mxu0 %v80
  %241 = vmatprep.subr.mxu0 0.0
  %242 = vmatpush1.msra.mxu0 %v81
  %243 = vmatprep.subr.mxu0 0.0
  %244 = vmatpush1.msra.mxu0 %v82
  %245 = vmatprep.subr.mxu0 0.0
  %246 = vmatpush1.msra.mxu0 %v83
  %247 = vmatprep.subr.mxu0 0.0
  %248 = vmatpush1.msra.mxu0 %v84
  %249 = vmatprep.subr.mxu0 0.0
  %250 = vmatpush1.msra.mxu0 %v85
  %251 = vmatprep.subr.mxu0 0.0
  %252 = vmatpush1.msra.mxu0 %v86
  %253 = vmatprep.subr.mxu0 0.0
  %254 = vmatpush1.msra.mxu0 %v87
  %255 = vmatprep.subr.mxu0 0.0
  %256 = vmatpush1.msra.mxu0 %v88
  %257 = vmatprep.subr.mxu0 0.0
  %258 = vmatpush1.msra.mxu0 %v89
  %259 = vmatprep.subr.mxu0 0.0
  %260 = vmatpush1.msra.mxu0 %v90
  %261 = vmatprep.subr.mxu0 0.0
  %262 = vmatpush1.msra.mxu0 %v91
  %263 = vmatprep.subr.mxu0 0.0
  %264 = vmatpush1.msra.mxu0 %v92
  %265 = vmatprep.subr.mxu0 0.0
  %266 = vmatpush1.msra.mxu0 %v93
  %267 = vmatprep.mubr.f32.mxu0 %v21
  %268 = vmatmul.mubr.f32.gmra.mrb[0].mxu0 %v20
  %v269 = vpop.f32.mrb[0].mxu0
  %v270 = vadd.f32 %v195, %v269
  %v271 = vpop.f32.mrb[0].mxu0
  %272 = vmatprep.mubr.f32.mxu0 %v27
  %273 = vmatmul.mubr.f32.gmra.mrb[0].mxu0 %v26
  %v274 = vpop.f32.mrb[0].mxu0
  %v275 = vadd.f32 %v200, %v274
  %v276 = vpop.f32.mrb[0].mxu0
  %277 = vdwg.mxu0
  %278 = vmatprep.subr.mxu0 0.0
  %279 = vmatpush1.msra.mxu0 %v94
  %280 = vmatprep.subr.mxu0 0.0
  %281 = vmatpush1.msra.mxu0 %v95
  %282 = vmatprep.subr.mxu0 0.0
  %283 = vmatpush1.msra.mxu0 %v96
  %284 = vmatprep.subr.mxu0 0.0
  %285 = vmatpush1.msra.mxu0 %v97
  %286 = vmatprep.subr.mxu0 0.0
  %287 = vmatpush1.msra.mxu0 %v98
  %288 = vmatprep.subr.mxu0 0.0
  %289 = vmatpush1.msra.mxu0 %v99
  %290 = vmatprep.subr.mxu0 0.0
  %291 = vmatpush1.msra.mxu0 %v100
  %292 = vmatprep.subr.mxu0 0.0
  %293 = vmatpush1.msra.mxu0 %v101
  %294 = vmatprep.subr.mxu0 0.0
  %295 = vmatpush1.msra.mxu0 %v102
  %296 = vmatprep.subr.mxu0 0.0
  %297 = vmatpush1.msra.mxu0 %v103
  %298 = vmatprep.subr.mxu0 0.0
  %299 = vmatpush1.msra.mxu0 %v104
  %300 = vmatprep.subr.mxu0 0.0
  %301 = vmatpush1.msra.mxu0 %v105
  %302 = vmatprep.subr.mxu0 0.0
  %303 = vmatpush1.msra.mxu0 %v106
  %304 = vmatprep.subr.mxu0 0.0
  %305 = vmatpush1.msra.mxu0 %v107
  %306 = vmatprep.subr.mxu0 0.0
  %307 = vmatpush1.msra.mxu0 %v108
  %308 = vmatprep.subr.mxu0 0.0
  %309 = vmatpush1.msra.mxu0 %v109
  %310 = vmatprep.subr.mxu0 0.0
  %311 = vmatpush1.msra.mxu0 %v110
  %312 = vmatprep.subr.mxu0 0.0
  %313 = vmatpush1.msra.mxu0 %v111
  %314 = vmatprep.subr.mxu0 0.0
  %315 = vmatpush1.msra.mxu0 %v112
  %316 = vmatprep.subr.mxu0 0.0
  %317 = vmatpush1.msra.mxu0 %v113
  %318 = vmatprep.subr.mxu0 0.0
  %319 = vmatpush1.msra.mxu0 %v114
  %320 = vmatprep.subr.mxu0 0.0
  %321 = vmatpush1.msra.mxu0 %v115
  %322 = vmatprep.subr.mxu0 0.0
  %323 = vmatpush1.msra.mxu0 %v116
  %324 = vmatprep.subr.mxu0 0.0
  %325 = vmatpush1.msra.mxu0 %v117
  %326 = vmatprep.subr.mxu0 0.0
  %327 = vmatpush1.msra.mxu0 %v118
  %328 = vmatprep.subr.mxu0 0.0
  %329 = vmatpush1.msra.mxu0 %v119
  %330 = vmatprep.subr.mxu0 0.0
  %331 = vmatpush1.msra.mxu0 %v120
  %332 = vmatprep.subr.mxu0 0.0
  %333 = vmatpush1.msra.mxu0 %v121
  %334 = vmatprep.subr.mxu0 0.0
  %335 = vmatpush1.msra.mxu0 %v122
  %336 = vmatprep.subr.mxu0 0.0
  %337 = vmatpush1.msra.mxu0 %v123
  %338 = vmatprep.subr.mxu0 0.0
  %339 = vmatpush1.msra.mxu0 %v124
  %340 = vmatprep.subr.mxu0 0.0
  %341 = vmatpush1.msra.mxu0 %v125
  %342 = vmatprep.mubr.f32.mxu0 %v23
  %343 = vmatmul.mubr.f32.gmra.mrb[0].mxu0 %v22
  %v344 = vpop.f32.mrb[0].mxu0
  %v345 = vadd.f32 %v270, %v344
  %v346 = vpop.f32.mrb[0].mxu0
  %347 = vmatprep.mubr.f32.mxu0 %v29
  %348 = vmatmul.mubr.f32.gmra.mrb[0].mxu0 %v28
  %v349 = vpop.f32.mrb[0].mxu0
  %v350 = vadd.f32 %v275, %v349
  %v351 = vpop.f32.mrb[0].mxu0
  %352 = vdwg.mxu0
  %v353 = vxor.u32 %v345, 2147483648
  %v354 = vxor.u32 %v350, 2147483648
  %v355 = vmul.f32 %v353, 1.442695
  %v356 = vpow.pop %v355
  %v357 = vmul.f32 %v354, 1.442695
  %v358 = vpow.pop %v357
  %v359 = vadd.f32 %v356, 1.0
  %v360 = vadd.f32 %v358, 1.0
  %v361 = vrcp.pop %v359
  %v362 = vmul.f32 1.0, %v361
  %v363 = vrcp.pop %v360
  %v364 = vmul.f32 1.0, %v363
  %v365 = vld [vmem:[%s3] sm:$0xff]
  %v366 = vld [vmem:[%s3 + $0x8] sm:$0xff]
  %v367 = vmul.f32 %v362, %v365
  %v368 = vmul.f32 %v364, %v366
  %vm369 = vcmask 7168
  %370 = vst.msk [vmem:[%s4] sm:$0xff] %vm369, %v367
  %371 = vst.msk [vmem:[%s4 + $0x8] sm:$0xff] %vm369, %v368
  // Predicated region
  $region18: #{tpu_custom_call.1} parent=0 // pred_check
    _
  $region19: #{tpu_custom_call.1} parent=0 // pred_check_branch
    %373 = sbr.rel (0) target = $region21
  $region20: #{tpu_custom_call.1} parent=0 // pred_region
    _
  $region21: #{tpu_custom_call.1} parent=0 // pred_fallthru
    _
  // Predicated region
  $region22: #{tpu_custom_call.1} parent=0 // pred_check
    _
  $region23: #{tpu_custom_call.1} parent=0 // pred_check_branch
    %375 = sbr.rel (0) target = $region25
  $region24: #{tpu_custom_call.1} parent=0 // pred_region
    _
  $region25: #{tpu_custom_call.1} parent=0 // pred_fallthru
    _

</llo_original>
